<compile_context>
chip_gen: v6e
topology: v6e:2x2x1
jax: 0.10.0
libtpu: 0.0.40
codegen_flags: <defaults>
</compile_context>

<pallas_src>
import functools

import jax
import jax.numpy as jnp
from jax.experimental import pallas as pl
from jax.experimental.pallas import tpu as pltpu


def _psp_loss_kernel(pred_ref, aux_ref, tgt_ref, out_ref, acc_ref,
                     *, aux_weight: float):
    # pred_ref / aux_ref: (1, C, TILE_P)   logits, classes on sublanes
    # tgt_ref:            (1, 1, TILE_P)   int32 class ids (< 0 == ignored/pad)
    # out_ref:            (1, 1, TILE_P)   per-lane partial sums for batch n
    # acc_ref:            (1, TILE_P)      VMEM vector accumulator
    p = pl.program_id(1)

    @pl.when(p == 0)
    def _init():
        acc_ref[...] = jnp.zeros_like(acc_ref)

    tgt = tgt_ref[0]                                   # (1, TILE_P) int32
    valid = tgt >= 0                                   # mask padded / ignored

    C = pred_ref.shape[1]
    TP = pred_ref.shape[2]

    # One-hot along the class (sublane) axis -- built once, reused for both
    # pred and aux.
    cls = jax.lax.broadcasted_iota(jnp.int32, (C, TP), 0)        # (C, TILE_P)
    onehot = (cls == tgt).astype(jnp.float32)                     # (C, TILE_P)

    def nll(logits_ref):
        x = logits_ref[0].astype(jnp.float32)                     # (C, TILE_P)
        m = jnp.max(x, axis=0, keepdims=True)                     # (1, TILE_P)
        lse = m + jnp.log(jnp.sum(jnp.exp(x - m), axis=0, keepdims=True))
        picked = jnp.sum(onehot * x, axis=0, keepdims=True)       # (1, TILE_P)
        return lse - picked                                       # (1, TILE_P)

    contrib = nll(pred_ref) + jnp.float32(aux_weight) * nll(aux_ref)
    acc_ref[...] += jnp.where(valid, contrib, jnp.float32(0.0))

    @pl.when(p == pl.num_programs(1) - 1)
    def _finalize():
        out_ref[0] = acc_ref[...]


def _round_up(a: int, b: int) -> int:
    return (a + b - 1) // b * b


def psp_loss(pred: jax.Array, aux: jax.Array, target: jax.Array,
             auxiliary_weight: float = 0.4, tile_pixels: int = 2048) -> jax.Array:
    """pred, aux: (N, C, H, W) logits.  target: (N, H, W) int class ids."""
    N, C, H, W = pred.shape
    assert aux.shape == pred.shape
    assert target.shape == (N, H, W)

    HW = H * W
    target = target.astype(jnp.int32)

    # Free reshapes -- no HBM transpose/copy of the big logit tensors.
    pred3 = pred.reshape(N, C, HW)
    aux3 = aux.reshape(N, C, HW)
    tgt3 = target.reshape(N, 1, HW)

    # Lane-dense pixel tile (multiple of 128); pad the ragged tail.
    if HW <= tile_pixels:
        tile_p = _round_up(HW, 128)
        hw_padded = tile_p
    else:
        tile_p = _round_up(tile_pixels, 128)
        hw_padded = _round_up(HW, tile_p)

    if hw_padded != HW:
        pad = hw_padded - HW
        pred3 = jnp.pad(pred3, ((0, 0), (0, 0), (0, pad)))
        aux3 = jnp.pad(aux3, ((0, 0), (0, 0), (0, pad)))
        tgt3 = jnp.pad(tgt3, ((0, 0), (0, 0), (0, pad)), constant_values=-1)

    n_ptiles = hw_padded // tile_p

    kernel = functools.partial(_psp_loss_kernel,
                               aux_weight=float(auxiliary_weight))

    partials = pl.pallas_call(
        kernel,
        out_shape=jax.ShapeDtypeStruct((N, 1, tile_p), jnp.float32),
        grid_spec=pltpu.PrefetchScalarGridSpec(
            num_scalar_prefetch=0,
            grid=(N, n_ptiles),
            in_specs=[
                pl.BlockSpec((1, C, tile_p), lambda n, p: (n, 0, p)),
                pl.BlockSpec((1, C, tile_p), lambda n, p: (n, 0, p)),
                pl.BlockSpec((1, 1, tile_p), lambda n, p: (n, 0, p)),
            ],
            out_specs=pl.BlockSpec((1, 1, tile_p), lambda n, p: (n, 0, 0)),
            scratch_shapes=[pltpu.VMEM((1, tile_p), jnp.float32)],
        ),
        compiler_params=pltpu.CompilerParams(
            # Batch axis shardable across TensorCores; pixel-tile axis
            # carries the accumulator -> "arbitrary".
            dimension_semantics=("parallel", "arbitrary"),
        ),
    )(pred3, aux3, tgt3)

    # Tiny final reduction over (N, 1, tile_p) partial sums done by XLA.
    # Denominator = count of non-ignored pixels (== N*H*W in the usual case),
    # matching F.cross_entropy's mean reduction with ignore_index.
    denom = jnp.maximum(jnp.sum((target >= 0).astype(jnp.float32)), 1.0)
    return jnp.sum(partials) / denom


def _reference(pred, aux, target, auxiliary_weight=0.4):
    """Pure-JAX reference matching F.cross_entropy(mean)."""
    def ce(logits, tgt):
        x = jnp.transpose(logits, (0, 2, 3, 1)).astype(jnp.float32)  # N,H,W,C
        logp = jax.nn.log_softmax(x, axis=-1)
        nll = -jnp.take_along_axis(logp, tgt[..., None], axis=-1)[..., 0]
        return jnp.mean(nll)
    return ce(pred, target) + auxiliary_weight * ce(aux, target)


if __name__ == "__main__":
    key = jax.random.PRNGKey(0)
    k1, k2, k3 = jax.random.split(key, 3)

    N, C, H, W = 2, 4, 16, 16
    pred = jax.random.normal(k1, (N, C, H, W), dtype=jnp.float32)
    aux = jax.random.normal(k2, (N, C, H, W), dtype=jnp.float32)
    target = jax.random.randint(k3, (N, H, W), 0, C, dtype=jnp.int32)

    loss = psp_loss(pred, aux, target, auxiliary_weight=0.4)
    loss = jax.block_until_ready(loss)

    ref = _reference(pred, aux, target, 0.4)
    assert jnp.allclose(loss, ref, atol=1e-5, rtol=1e-5), (loss, ref)

    print("KERNEL_OK")
</pallas_src>

<mosaic_0001>
module attributes {stable_mosaic.version = 11 : i64} {
  func.func @_psp_loss_kernel(%arg0: i32, %arg1: i32, %arg2: memref<1x4x256xf32, #tpu.memory_space<vmem>>, %arg3: memref<1x4x256xf32, #tpu.memory_space<vmem>>, %arg4: memref<1x1x256xi32, #tpu.memory_space<vmem>>, %arg5: memref<1x1x256xf32, #tpu.memory_space<vmem>>, %arg6: memref<1x256xf32, #tpu.memory_space<vmem>>) attributes {dimension_semantics = [#tpu.dimension_semantics<parallel>, #tpu.dimension_semantics<arbitrary>], iteration_bounds = array<i64: 2, 1>, scalar_prefetch = 0 : i64, scratch_operands = 1 : i64, tpu.core_type = #tpu.core_type<tc>, window_params = [{transform_indices = @transform_0, window_bounds = array<i64: 1, 4, 256>}, {transform_indices = @transform_1, window_bounds = array<i64: 1, 4, 256>}, {transform_indices = @transform_2, window_bounds = array<i64: 1, 1, 256>}, {transform_indices = @transform_3, window_bounds = array<i64: 1, 1, 256>}]} {
    %c0_i32 = arith.constant 0 : i32
    %0 = arith.cmpi eq, %arg1, %c0_i32 : i32
    %1 = arith.extui %0 : i1 to i32
    %c0_i32_0 = arith.constant 0 : i32
    %2 = arith.cmpi ne, %1, %c0_i32_0 : i32
    scf.if %2 {
      %cst_23 = arith.constant 0.000000e+00 : f32
      %53 = vector.broadcast %cst_23 : f32 to vector<1x256xf32>
      %c0_24 = arith.constant 0 : index
      %c0_25 = arith.constant 0 : index
      %54 = vector.load %arg6[%c0_24, %c0_25] : memref<1x256xf32, #tpu.memory_space<vmem>>, vector<1x256xf32>
      tpu.vector_store %arg6[%c0_24, %c0_25], %53 {strides = array<i32>} : memref<1x256xf32, #tpu.memory_space<vmem>>, vector<1x256xf32>,
    } else {
    }
    %c0 = arith.constant 0 : index
    %c0_1 = arith.constant 0 : index
    %c0_2 = arith.constant 0 : index
    %3 = vector.load %arg4[%c0, %c0_1, %c0_2] : memref<1x1x256xi32, #tpu.memory_space<vmem>>, vector<1x1x256xi32>
    %4 = vector.shape_cast %3 : vector<1x1x256xi32> to vector<1x256xi32>
    %c0_i32_3 = arith.constant 0 : i32
    %5 = vector.broadcast %c0_i32_3 : i32 to vector<1x256xi32>
    %6 = arith.cmpi sge, %4, %5 : vector<1x256xi32>
    %7 = tpu.iota {dimensions = array<i32: 0>} : vector<4x256xi32>
    %8 = vector.broadcast %4 : vector<1x256xi32> to vector<4x256xi32>
    %9 = arith.cmpi eq, %7, %8 : vector<4x256xi32>
    %10 = arith.extui %9 : vector<4x256xi1> to vector<4x256xi32>
    %11 = arith.sitofp %10 : vector<4x256xi32> to vector<4x256xf32>
    %c0_4 = arith.constant 0 : index
    %c0_5 = arith.constant 0 : index
    %c0_6 = arith.constant 0 : index
    %12 = vector.load %arg2[%c0_4, %c0_5, %c0_6] : memref<1x4x256xf32, #tpu.memory_space<vmem>>, vector<1x4x256xf32>
    %13 = vector.shape_cast %12 : vector<1x4x256xf32> to vector<4x256xf32>
    %cst = arith.constant dense<0xFF800000> : vector<256xf32>
    %14 = vector.multi_reduction <maximumf>, %13, %cst [0] : vector<4x256xf32> to vector<256xf32>
    %15 = vector.shape_cast %14 : vector<256xf32> to vector<1x256xf32>
    %16 = vector.broadcast %15 : vector<1x256xf32> to vector<4x256xf32>
    %17 = arith.subf %13, %16 : vector<4x256xf32>
    %18 = math.exp %17 : vector<4x256xf32>
    %cst_7 = arith.constant dense<0.000000e+00> : vector<256xf32>
    %19 = vector.multi_reduction <add>, %18, %cst_7 [0] : vector<4x256xf32> to vector<256xf32>
    %20 = vector.shape_cast %19 : vector<256xf32> to vector<1x256xf32>
    %21 = math.log %20 : vector<1x256xf32>
    %22 = arith.addf %15, %21 : vector<1x256xf32>
    %23 = arith.mulf %11, %13 : vector<4x256xf32>
    %cst_8 = arith.constant dense<0.000000e+00> : vector<256xf32>
    %24 = vector.multi_reduction <add>, %23, %cst_8 [0] : vector<4x256xf32> to vector<256xf32>
    %25 = vector.shape_cast %24 : vector<256xf32> to vector<1x256xf32>
    %26 = arith.subf %22, %25 : vector<1x256xf32>
    %c0_9 = arith.constant 0 : index
    %c0_10 = arith.constant 0 : index
    %c0_11 = arith.constant 0 : index
    %27 = vector.load %arg3[%c0_9, %c0_10, %c0_11] : memref<1x4x256xf32, #tpu.memory_space<vmem>>, vector<1x4x256xf32>
    %28 = vector.shape_cast %27 : vector<1x4x256xf32> to vector<4x256xf32>
    %cst_12 = arith.constant dense<0xFF800000> : vector<256xf32>
    %29 = vector.multi_reduction <maximumf>, %28, %cst_12 [0] : vector<4x256xf32> to vector<256xf32>
    %30 = vector.shape_cast %29 : vector<256xf32> to vector<1x256xf32>
    %31 = vector.broadcast %30 : vector<1x256xf32> to vector<4x256xf32>
    %32 = arith.subf %28, %31 : vector<4x256xf32>
    %33 = math.exp %32 : vector<4x256xf32>
    %cst_13 = arith.constant dense<0.000000e+00> : vector<256xf32>
    %34 = vector.multi_reduction <add>, %33, %cst_13 [0] : vector<4x256xf32> to vector<256xf32>
    %35 = vector.shape_cast %34 : vector<256xf32> to vector<1x256xf32>
    %36 = math.log %35 : vector<1x256xf32>
    %37 = arith.addf %30, %36 : vector<1x256xf32>
    %38 = arith.mulf %11, %28 : vector<4x256xf32>
    %cst_14 = arith.constant dense<0.000000e+00> : vector<256xf32>
    %39 = vector.multi_reduction <add>, %38, %cst_14 [0] : vector<4x256xf32> to vector<256xf32>
    %40 = vector.shape_cast %39 : vector<256xf32> to vector<1x256xf32>
    %41 = arith.subf %37, %40 : vector<1x256xf32>
    %cst_15 = arith.constant 4.000000e-01 : f32
    %42 = vector.broadcast %cst_15 : f32 to vector<1x256xf32>
    %43 = arith.mulf %42, %41 : vector<1x256xf32>
    %44 = arith.addf %26, %43 : vector<1x256xf32>
    %c0_16 = arith.constant 0 : index
    %c0_17 = arith.constant 0 : index
    %45 = vector.load %arg6[%c0_16, %c0_17] : memref<1x256xf32, #tpu.memory_space<vmem>>, vector<1x256xf32>
    %cst_18 = arith.constant 0.000000e+00 : f32
    %46 = vector.broadcast %cst_18 : f32 to vector<1x256xf32>
    %47 = arith.select %6, %44, %46 : vector<1x256xi1>, vector<1x256xf32>
    %48 = arith.addf %45, %47 : vector<1x256xf32>
    %c0_19 = arith.constant 0 : index
    %c0_20 = arith.constant 0 : index
    %49 = vector.load %arg6[%c0_19, %c0_20] : memref<1x256xf32, #tpu.memory_space<vmem>>, vector<1x256xf32>
    tpu.vector_store %arg6[%c0_19, %c0_20], %48 {strides = array<i32>} : memref<1x256xf32, #tpu.memory_space<vmem>>, vector<1x256xf32>,
    %c0_i32_21 = arith.constant 0 : i32
    %50 = arith.cmpi eq, %arg1, %c0_i32_21 : i32
    %51 = arith.extui %50 : i1 to i32
    %c0_i32_22 = arith.constant 0 : i32
    %52 = arith.cmpi ne, %51, %c0_i32_22 : i32
    scf.if %52 {
      %c0_23 = arith.constant 0 : index
      %c0_24 = arith.constant 0 : index
      %53 = vector.load %arg6[%c0_23, %c0_24] : memref<1x256xf32, #tpu.memory_space<vmem>>, vector<1x256xf32>
      %c0_25 = arith.constant 0 : index
      %c0_26 = arith.constant 0 : index
      %c0_27 = arith.constant 0 : index
      %54 = vector.load %arg5[%c0_25, %c0_26, %c0_27] : memref<1x1x256xf32, #tpu.memory_space<vmem>>, vector<1x1x256xf32>
      %55 = vector.shape_cast %54 : vector<1x1x256xf32> to vector<1x256xf32>
      %56 = vector.shape_cast %53 : vector<1x256xf32> to vector<1x1x256xf32>
      tpu.vector_store %arg5[%c0_25, %c0_26, %c0_27], %56 {strides = array<i32>} : memref<1x1x256xf32, #tpu.memory_space<vmem>>, vector<1x1x256xf32>,
    } else {
    }
    return
  }
  func.func @transform_0(%arg0: i32, %arg1: i32) -> (i32, i32, i32) {
    %c0_i32 = arith.constant 0 : i32
    %c0_i32_0 = arith.constant 0 : i32
    return %arg0, %c0_i32, %arg1 : i32, i32, i32
  }
  func.func @transform_1(%arg0: i32, %arg1: i32) -> (i32, i32, i32) {
    %c0_i32 = arith.constant 0 : i32
    %c0_i32_0 = arith.constant 0 : i32
    return %arg0, %c0_i32, %arg1 : i32, i32, i32
  }
  func.func @transform_2(%arg0: i32, %arg1: i32) -> (i32, i32, i32) {
    %c0_i32 = arith.constant 0 : i32
    %c0_i32_0 = arith.constant 0 : i32
    return %arg0, %c0_i32, %arg1 : i32, i32, i32
  }
  func.func @transform_3(%arg0: i32, %arg1: i32) -> (i32, i32, i32) {
    %c0_i32 = arith.constant 0 : i32
    %c0_i32_0 = arith.constant 0 : i32
    %c0_i32_1 = arith.constant 0 : i32
    return %arg0, %c0_i32, %c0_i32_0 : i32, i32, i32
  }
}

</mosaic_0001>

<llo_original>
// kernel: tpu_custom_call.1
$region0: #{tpu_custom_call.1}
  #allocation0 [shape = 'u32[]', space=smem, size = 0x4, offset = 0x4, fixed_abs, tag = 'smem constant byte address 0x4 - core index']
  #allocation1 [shape = 'u32[144,128]{1,0:T(1,128)}', space=vmem, size = 0x12000, scoped, tag = 'internal scratch']
  #allocation2 [shape = 'f32[1,256]{1,0:T(1,128)}', space=vmem, size = 0x400, scoped, tag = 'scratch operand']
  %s0 = inlined_call_operand.hbm [shape: f32[2,4,256], index: 0, kind: input, shape index: {}]
  %s1 = inlined_call_operand.hbm [shape: f32[2,4,256], index: 1, kind: input, shape index: {}]
  %s2 = inlined_call_operand.hbm [shape: s32[2,1,256], index: 2, kind: input, shape index: {}]
  %s3 = inlined_call_operand.hbm [shape: f32[2,1,256], index: 3, kind: output, shape index: {}]
  %s4 = sld [smem:[#allocation0]]
  $region65: #{tpu_custom_call.1} parent=0
    _
  %s6 = ssub.s32 1, %s4
  %s7 = scalar_select 0, %s6, %s4
  $region1: #{tpu_custom_call.1} parent=0
    #allocation3 [shape = 'u8[8192]{0}', space=vmem, size = 0x2000, scoped, tag = 'input window, operand 0']
    #allocation4 [shape = 's32[2]{0}', space=sflag, size = 0x8, scoped, tag = 'scoped memory for tpu_custom_call.1']
    #allocation5 [shape = 's32[2]{0}', space=sflag, size = 0x8, scoped, tag = 'scoped memory for tpu_custom_call.1']
    #allocation6 [shape = 'u8[8192]{0}', space=vmem, size = 0x2000, scoped, tag = 'input window, operand 1']
    #allocation7 [shape = 's32[2]{0}', space=sflag, size = 0x8, scoped, tag = 'scoped memory for tpu_custom_call.1']
    #allocation8 [shape = 'u8[2048]{0}', space=vmem, size = 0x800, scoped, tag = 'input window, operand 2']
    #allocation9 [shape = 'u8[2048]{0}', space=vmem, size = 0x800, scoped, tag = 'output window, operand 0']
    %8 = vsyncpa [#allocation4], 0
    %s9 = scalar_lea.sflag [#allocation4], 1
    %10 = vsyncpa %s9, 0
    %11 = vsyncpa [#allocation7], 0
    %s12 = scalar_lea.sflag [#allocation7], 1
    %13 = vsyncpa %s12, 0
    %14 = vsyncpa [#allocation5], 0
    %s15 = scalar_lea.sflag [#allocation5], 1
    %16 = vsyncpa %s15, 0
    loop: start=0, step=1, limit=4
    $region2: #{tpu_custom_call.1} parent=1 // loop_pre_header
      _
    $region3: #{tpu_custom_call.1} parent=1 // loop_header
      %s18 = sphi 0, %s22
      %p19 = scmp.ge.s32.totalorder %s18, 4
      %s25 = sphi 0, %s37
      %s26 = sphi 0, %s33
      %s27 = sphi 0, %s25
      %s28 = sphi 0, %s26
      %s29 = sphi 0, %s27
      %s30 = sphi 0, %s28
      %s42 = sphi 0, %s44
      %s45 = sphi 0, %s42
      %s46 = sphi 0, %s45
      %s62 = sphi 0, %s46
      %s70 = sphi 0, %s72
      %s73 = sphi 0, %s70
      %s74 = sphi 0, %s73
      %s90 = sphi 0, %s74
      %s98 = sphi 0, %s100
      %s101 = sphi 0, %s98
      %s102 = sphi 0, %s101
      %s118 = sphi 0, %s102
      %s124 = sphi 0, %s126
      %s127 = sphi 0, %s124
      %s128 = sphi 0, %s127
      %s144 = sphi 0, %s128
    $region4: #{tpu_custom_call.1} parent=1 // loop_header_branch
      %21 = sbr.rel (%p19) target = $region8
    $region5: #{tpu_custom_call.1} parent=1 // loop_body
      %s23 = ssub.s32 %s18, 1
      %s24 = ssub.s32 %s18, 2
      %s31 = sadd.s32 1, %s26
      %p32 = scmp.ge.s32.totalorder %s31, 1
      %s33 = scalar_select %p32, 0, %s31
      %s34 = sadd.s32 1, %s25
      %s35 = scalar_select %p32, %s34, %s25
      %p36 = scmp.ge.s32.totalorder %s35, 2
      %s37 = scalar_select %p36, 0, %s35
      %s38 = ssub.s32 %s25, %s37
      %s39 = ssub.s32 %s26, %s33
      %s40 = sor.u32 %s38, %s39
      %p41 = scmp.eq.s32.totalorder %s40, 0
      %s43 = sadd.s32 %s42, 1
      %s44 = scalar_select %p41, %s42, %s43
      %p47 = pneg %p41
      %p48 = scmp.eq.s32.totalorder %s18, 1
      %p49 = por %p47, %p48
      %p50 = scmp.ne.s32.totalorder %s42, %s45
      %p51 = scmp.eq.s32.totalorder %s18, 0
      %p52 = por %p50, %p51
      %p53 = scmp.ne.s32.totalorder %s42, %s45
      %p54 = scmp.eq.s32.totalorder %s23, 1
      %p55 = por %p53, %p54
      %p56 = scmp.ne.s32.totalorder %s45, %s46
      %p57 = scmp.eq.s32.totalorder %s23, 0
      %p58 = por %p56, %p57
      %p59 = scmp.ne.s32.totalorder %s45, %s46
      %p60 = scmp.eq.s32.totalorder %s24, 1
      %p61 = por %p59, %p60
      %p63 = scmp.ne.s32.totalorder %s46, %s62
      %p64 = scmp.eq.s32.totalorder %s24, 0
      %p65 = por %p63, %p64
      %s66 = ssub.s32 %s25, %s37
      %s67 = ssub.s32 %s26, %s33
      %s68 = sor.u32 %s66, %s67
      %p69 = scmp.eq.s32.totalorder %s68, 0
      %s71 = sadd.s32 %s70, 1
      %s72 = scalar_select %p69, %s70, %s71
      %p75 = pneg %p69
      %p76 = scmp.eq.s32.totalorder %s18, 1
      %p77 = por %p75, %p76
      %p78 = scmp.ne.s32.totalorder %s70, %s73
      %p79 = scmp.eq.s32.totalorder %s18, 0
      %p80 = por %p78, %p79
      %p81 = scmp.ne.s32.totalorder %s70, %s73
      %p82 = scmp.eq.s32.totalorder %s23, 1
      %p83 = por %p81, %p82
      %p84 = scmp.ne.s32.totalorder %s73, %s74
      %p85 = scmp.eq.s32.totalorder %s23, 0
      %p86 = por %p84, %p85
      %p87 = scmp.ne.s32.totalorder %s73, %s74
      %p88 = scmp.eq.s32.totalorder %s24, 1
      %p89 = por %p87, %p88
      %p91 = scmp.ne.s32.totalorder %s74, %s90
      %p92 = scmp.eq.s32.totalorder %s24, 0
      %p93 = por %p91, %p92
      %s94 = ssub.s32 %s25, %s37
      %s95 = ssub.s32 %s26, %s33
      %s96 = sor.u32 %s94, %s95
      %p97 = scmp.eq.s32.totalorder %s96, 0
      %s99 = sadd.s32 %s98, 1
      %s100 = scalar_select %p97, %s98, %s99
      %p103 = pneg %p97
      %p104 = scmp.eq.s32.totalorder %s18, 1
      %p105 = por %p103, %p104
      %p106 = scmp.ne.s32.totalorder %s98, %s101
      %p107 = scmp.eq.s32.totalorder %s18, 0
      %p108 = por %p106, %p107
      %p109 = scmp.ne.s32.totalorder %s98, %s101
      %p110 = scmp.eq.s32.totalorder %s23, 1
      %p111 = por %p109, %p110
      %p112 = scmp.ne.s32.totalorder %s101, %s102
      %p113 = scmp.eq.s32.totalorder %s23, 0
      %p114 = por %p112, %p113
      %p115 = scmp.ne.s32.totalorder %s101, %s102
      %p116 = scmp.eq.s32.totalorder %s24, 1
      %p117 = por %p115, %p116
      %p119 = scmp.ne.s32.totalorder %s102, %s118
      %p120 = scmp.eq.s32.totalorder %s24, 0
      %p121 = por %p119, %p120
      %s122 = ssub.s32 %s25, %s37
      %p123 = scmp.eq.s32.totalorder %s122, 0
      %s125 = sadd.s32 %s124, 1
      %s126 = scalar_select %p123, %s124, %s125
      %p129 = pneg %p123
      %p130 = scmp.eq.s32.totalorder %s18, 1
      %p131 = por %p129, %p130
      %p132 = scmp.ne.s32.totalorder %s124, %s127
      %p133 = scmp.eq.s32.totalorder %s18, 0
      %p134 = por %p132, %p133
      %p135 = scmp.ne.s32.totalorder %s124, %s127
      %p136 = scmp.eq.s32.totalorder %s23, 1
      %p137 = por %p135, %p136
      %p138 = scmp.ne.s32.totalorder %s127, %s128
      %p139 = scmp.eq.s32.totalorder %s23, 0
      %p140 = por %p138, %p139
      %p141 = scmp.ne.s32.totalorder %s127, %s128
      %p142 = scmp.eq.s32.totalorder %s24, 1
      %p143 = por %p141, %p142
      %p145 = scmp.ne.s32.totalorder %s128, %s144
      %p146 = scmp.eq.s32.totalorder %s24, 0
      %p147 = por %p145, %p146
      %p148 = scmp.le.s32.totalorder 1, %s18
      %p149 = scmp.lt.s32.totalorder %s18, 3
      %p150 = pnand %p148, %p149
      %p151 = pneg %p150
      // Predicated region
      $region9: #{tpu_custom_call.1} parent=5 // pred_check
        _
      $region10: #{tpu_custom_call.1} parent=5 // pred_check_branch
        %153 = sbr.rel (%p150) target = $region12
      $region11: #{tpu_custom_call.1} parent=5 // pred_region
        %s154 = ssub.s32 %s18, 1
      $region12: #{tpu_custom_call.1} parent=5 // pred_fallthru
        _
      %p155 = scmp.lt.s32.totalorder %s18, 2
      // Predicated region
      $region13: #{tpu_custom_call.1} parent=5 // pred_check
        %p156 = pneg %p155
      $region14: #{tpu_custom_call.1} parent=5 // pred_check_branch
        %158 = sbr.rel (%p156) target = $region16
      $region15: #{tpu_custom_call.1} parent=5 // pred_region
        // Predicated region
        $region17: #{tpu_custom_call.1} parent=15 // pred_check
          %p159 = pneg %p52
        $region18: #{tpu_custom_call.1} parent=15 // pred_check_branch
          %161 = sbr.rel (%p159) target = $region20
        $region19: #{tpu_custom_call.1} parent=15 // pred_region
          %s162 = sand.u32 %s42, 1
          %s163 = scalar_lea.sflag [#allocation4], %s162
          %s164 = sand.u32 %s42, 1
          %s165 = smul.addr %s164, 8
          %s166 = scalar_lea.vmem [#allocation3], %s165
          %s167 = smul.u32 2, %s26
          %s169 = ssub.s32 128, 128
          %170 = vsyncadd %s163, %s169
          %s171 = smul.addr %s25, 2
          %s172 = sadd.s32 %s167, %s171
          %s173 = smul.addr %s172, 64
          %s174 = scalar_lea.hbm %s0, %s173
          %s176 = sshll.u32 %s166, 4
          %s177 = int_to_ptr.vmem [resolvable:$true] %s176
          %179 = dma.hbm_to_vmem [thread:$0]  %s174, 128, %s177, %s163
        $region20: #{tpu_custom_call.1} parent=15 // pred_fallthru
          _
        // Predicated region
        $region21: #{tpu_custom_call.1} parent=15 // pred_check
          %p180 = pneg %p80
        $region22: #{tpu_custom_call.1} parent=15 // pred_check_branch
          %182 = sbr.rel (%p180) target = $region24
        $region23: #{tpu_custom_call.1} parent=15 // pred_region
          %s183 = sand.u32 %s18, 1
          %s184 = scalar_lea.sflag [#allocation7], %s183
          %s185 = sand.u32 %s70, 1
          %s186 = smul.addr %s185, 8
          %s187 = scalar_lea.vmem [#allocation6], %s186
          %s188 = smul.u32 2, %s26
          %s190 = ssub.s32 128, 128
          %191 = vsyncadd %s184, %s190
          %s192 = smul.addr %s25, 2
          %s193 = sadd.s32 %s188, %s192
          %s194 = smul.addr %s193, 64
          %s195 = scalar_lea.hbm %s1, %s194
          %s197 = sshll.u32 %s187, 4
          %s198 = int_to_ptr.vmem [resolvable:$true] %s197
          %200 = dma.hbm_to_vmem [thread:$0]  %s195, 128, %s198, %s184
        $region24: #{tpu_custom_call.1} parent=15 // pred_fallthru
          _
        // Predicated region
        $region25: #{tpu_custom_call.1} parent=15 // pred_check
          %p201 = pneg %p108
        $region26: #{tpu_custom_call.1} parent=15 // pred_check_branch
          %203 = sbr.rel (%p201) target = $region28
        $region27: #{tpu_custom_call.1} parent=15 // pred_region
          %s204 = sand.u32 %s18, 1
          %s205 = scalar_lea.sflag [#allocation7], %s204
          %s206 = sand.u32 %s98, 1
          %s207 = smul.addr %s206, 2
          %s208 = scalar_lea.vmem [#allocation8], %s207
          %s209 = smul.u32 2, %s26
          %s211 = ssub.s32 32, 32
          %212 = vsyncadd %s205, %s211
          %s213 = smul.addr %s25, 2
          %s214 = sadd.s32 %s209, %s213
          %s215 = smul.addr %s214, 16
          %s216 = scalar_lea.hbm %s2, %s215
          %s218 = sshll.u32 %s208, 4
          %s219 = int_to_ptr.vmem [resolvable:$true] %s218
          %221 = dma.hbm_to_vmem [thread:$0]  %s216, 32, %s219, %s205
        $region28: #{tpu_custom_call.1} parent=15 // pred_fallthru
          _
      $region16: #{tpu_custom_call.1} parent=5 // pred_fallthru
        _
      %p222 = scmp.le.s32.totalorder 1, %s18
      %p223 = scmp.lt.s32.totalorder %s18, 3
      %p224 = pnand %p222, %p223
      %p225 = pneg %p224
      // Predicated region
      $region29: #{tpu_custom_call.1} parent=5 // pred_check
        _
      $region30: #{tpu_custom_call.1} parent=5 // pred_check_branch
        %227 = sbr.rel (%p224) target = $region32
      $region31: #{tpu_custom_call.1} parent=5 // pred_region
        %s228 = ssub.s32 %s18, 1
        %s229 = sand.u32 %s45, 1
        %s230 = scalar_lea.sflag [#allocation4], %s229
        %s231 = sand.u32 %s45, 1
        %s232 = smul.addr %s231, 8
        %s233 = scalar_lea.vmem [#allocation3], %s232
        // Predicated region
        $region33: #{tpu_custom_call.1} parent=31 // pred_check
          %p234 = pneg %p58
        $region34: #{tpu_custom_call.1} parent=31 // pred_check_branch
          %236 = sbr.rel (%p234) target = $region36
        $region35: #{tpu_custom_call.1} parent=31 // pred_region
          %237 = dma.done %s230, 128
        $region36: #{tpu_custom_call.1} parent=31 // pred_fallthru
          _
        %s238 = sand.u32 %s23, 1
        %s239 = scalar_lea.sflag [#allocation7], %s238
        %s240 = sand.u32 %s73, 1
        %s241 = smul.addr %s240, 8
        %s242 = scalar_lea.vmem [#allocation6], %s241
        // Predicated region
        $region37: #{tpu_custom_call.1} parent=31 // pred_check
          %p243 = pneg %p86
        $region38: #{tpu_custom_call.1} parent=31 // pred_check_branch
          %245 = sbr.rel (%p243) target = $region40
        $region39: #{tpu_custom_call.1} parent=31 // pred_region
          %246 = dma.done %s239, 128
        $region40: #{tpu_custom_call.1} parent=31 // pred_fallthru
          _
        %s247 = sand.u32 %s23, 1
        %s248 = scalar_lea.sflag [#allocation7], %s247
        %s249 = sand.u32 %s101, 1
        %s250 = smul.addr %s249, 2
        %s251 = scalar_lea.vmem [#allocation8], %s250
        // Predicated region
        $region41: #{tpu_custom_call.1} parent=31 // pred_check
          %p252 = pneg %p114
        $region42: #{tpu_custom_call.1} parent=31 // pred_check_branch
          %254 = sbr.rel (%p252) target = $region44
        $region43: #{tpu_custom_call.1} parent=31 // pred_region
          %255 = dma.done %s248, 32
        $region44: #{tpu_custom_call.1} parent=31 // pred_fallthru
          _
        %s256 = sand.u32 %s45, 1
        %s257 = scalar_lea.sflag [#allocation4], %s256
        %s258 = sand.u32 %s45, 1
        %s259 = smul.addr %s258, 8
        %s260 = scalar_lea.vmem [#allocation3], %s259
        %p261 = pneg %p58
        %p262 = pneg %p55
        %s263 = sand.u32 %s23, 1
        %s264 = scalar_lea.sflag [#allocation7], %s263
        %s265 = sand.u32 %s73, 1
        %s266 = smul.addr %s265, 8
        %s267 = scalar_lea.vmem [#allocation6], %s266
        %p268 = pneg %p86
        %p269 = pneg %p83
        %s270 = sand.u32 %s23, 1
        %s271 = scalar_lea.sflag [#allocation7], %s270
        %s272 = sand.u32 %s101, 1
        %s273 = smul.addr %s272, 2
        %s274 = scalar_lea.vmem [#allocation8], %s273
        %p275 = pneg %p114
        %p276 = pneg %p111
        %p277 = pneg %p140
        %p278 = pneg %p137
        %s279 = sand.u32 %s127, 1
        %s280 = scalar_lea.sflag [#allocation5], %s279
        %s281 = sand.u32 %s127, 1
        %s282 = smul.addr %s281, 2
        %s283 = scalar_lea.vmem [#allocation9], %s282
        %s284 = smul.u32 2, %s28
        %s285 = smul.u32 2, %s28
        %s286 = smul.u32 2, %s28
        %p287 = scmp.eq.s32.totalorder %s28, 0
        // Predicated region
        $region45: #{tpu_custom_call.1} parent=31 // pred_check
          %p288 = pneg %p287
        $region46: #{tpu_custom_call.1} parent=31 // pred_check_branch
          %290 = sbr.rel (%p288) target = $region48
        $region47: #{tpu_custom_call.1} parent=31 // pred_region
          %v291 = vlaneseq
          %vm292 = vcmp.ge.s32.totalorder %v291, 0
          %vm293 = vcmp.lt.s32.totalorder %v291, 256
          %vm294 = vmand %vm292, %vm293
          %295 = vst.msk [vmem:[#allocation2] sm:$0x3] %vm294, 0.0
        $region48: #{tpu_custom_call.1} parent=31 // pred_fallthru
          _
        %v296 = vld [vmem:[%s251] sm:$0x3]
        %vm297 = vcmp.ge.s32.totalorder %v296, 0
        %v298 = vlaneseq
        %v299 = vshrl.u32 %v298, 7
        %v300 = vlaneseq
        %v301 = vshrl.u32 %v300, 7
        %v302 = vsub.s32 0, %v301
        %v303 = vrot.slane %v296, %v302
        %v304 = vlaneseq
        %v305 = vshrl.u32 %v304, 7
        %v306 = vsub.s32 1, %v305
        %v307 = vrot.slane %v296, %v306
        %vm308 = vcmp.eq.s32.totalorder %v299, %v303
        %vm309 = vcmp.eq.s32.totalorder %v299, %v307
        %v310 = vsel %vm308, 1, 0
        %v311 = vsel %vm309, 1, 0
        %v312 = vcvt.s32.f32 %v310
        %v313 = vcvt.s32.f32 %v311
        %v314 = vld [vmem:[%s233] sm:$0xff]
        %v316 = vcombine.high %v314, %v314
        %vm318 = vcmask 1043456
        %v319 = vsel %vm318, %v314, -inf
        %v320 = vrot.slane %v319, 4
        %v321 = vmax.f32 %v319, %v320
        %v322 = vrot.slane %v321, 2
        %v323 = vmax.f32 %v321, %v322
        %v324 = vrot.slane %v323, 1
        %v325 = vmax.f32 %v323, %v324
        %v326 = vsel %vm318, %v316, -inf
        %v327 = vrot.slane %v326, 4
        %v328 = vmax.f32 %v326, %v327
        %v329 = vrot.slane %v328, 2
        %v330 = vmax.f32 %v328, %v329
        %v331 = vrot.slane %v330, 1
        %v332 = vmax.f32 %v330, %v331
        %v335 = vcombine.low %v325, %v332
        %v337 = vsub.f32 %v314, %v335
        %v338 = vmul.f32 %v337, 1.442695
        %v339 = vpow.pop %v338
        %v341 = vcombine.high %v339, %v339
        %v343 = vsel %vm318, %v339, 0.0
        %v344 = vrot.slane %v343, 4
        %v345 = vadd.f32 %v343, %v344
        %v346 = vrot.slane %v345, 2
        %v347 = vadd.f32 %v345, %v346
        %v348 = vrot.slane %v347, 1
        %v349 = vadd.f32 %v347, %v348
        %v350 = vsel %vm318, %v341, 0.0
        %v351 = vrot.slane %v350, 4
        %v352 = vadd.f32 %v350, %v351
        %v353 = vrot.slane %v352, 2
        %v354 = vadd.f32 %v352, %v353
        %v355 = vrot.slane %v354, 1
        %v356 = vadd.f32 %v354, %v355
        %v357 = vlog2.pop %v349
        %v358 = vmul.f32 %v357, 0.6931472
        %v359 = vlog2.pop %v356
        %v360 = vmul.f32 %v359, 0.6931472
        %v361 = vadd.f32 %v325, %v358
        %v362 = vadd.f32 %v332, %v360
        %v363 = vmul.f32 %v312, %v314
        %v364 = vmul.f32 %v313, %v316
        %v365 = vsel %vm318, %v363, 0.0
        %v366 = vrot.slane %v365, 4
        %v367 = vadd.f32 %v365, %v366
        %v368 = vrot.slane %v367, 2
        %v369 = vadd.f32 %v367, %v368
        %v370 = vrot.slane %v369, 1
        %v371 = vadd.f32 %v369, %v370
        %v372 = vsel %vm318, %v364, 0.0
        %v373 = vrot.slane %v372, 4
        %v374 = vadd.f32 %v372, %v373
        %v375 = vrot.slane %v374, 2
        %v376 = vadd.f32 %v374, %v375
        %v377 = vrot.slane %v376, 1
        %v378 = vadd.f32 %v376, %v377
        %v379 = vsub.f32 %v361, %v371
        %v380 = vsub.f32 %v362, %v378
        %v381 = vld [vmem:[%s242] sm:$0xff]
        %v383 = vcombine.high %v381, %v381
        %v385 = vsel %vm318, %v381, -inf
        %v386 = vrot.slane %v385, 4
        %v387 = vmax.f32 %v385, %v386
        %v388 = vrot.slane %v387, 2
        %v389 = vmax.f32 %v387, %v388
        %v390 = vrot.slane %v389, 1
        %v391 = vmax.f32 %v389, %v390
        %v392 = vsel %vm318, %v383, -inf
        %v393 = vrot.slane %v392, 4
        %v394 = vmax.f32 %v392, %v393
        %v395 = vrot.slane %v394, 2
        %v396 = vmax.f32 %v394, %v395
        %v397 = vrot.slane %v396, 1
        %v398 = vmax.f32 %v396, %v397
        %v401 = vcombine.low %v391, %v398
        %v403 = vsub.f32 %v381, %v401
        %v404 = vmul.f32 %v403, 1.442695
        %v405 = vpow.pop %v404
        %v407 = vcombine.high %v405, %v405
        %v409 = vsel %vm318, %v405, 0.0
        %v410 = vrot.slane %v409, 4
        %v411 = vadd.f32 %v409, %v410
        %v412 = vrot.slane %v411, 2
        %v413 = vadd.f32 %v411, %v412
        %v414 = vrot.slane %v413, 1
        %v415 = vadd.f32 %v413, %v414
        %v416 = vsel %vm318, %v407, 0.0
        %v417 = vrot.slane %v416, 4
        %v418 = vadd.f32 %v416, %v417
        %v419 = vrot.slane %v418, 2
        %v420 = vadd.f32 %v418, %v419
        %v421 = vrot.slane %v420, 1
        %v422 = vadd.f32 %v420, %v421
        %v423 = vlog2.pop %v415
        %v424 = vmul.f32 %v423, 0.6931472
        %v425 = vlog2.pop %v422
        %v426 = vmul.f32 %v425, 0.6931472
        %v427 = vadd.f32 %v391, %v424
        %v428 = vadd.f32 %v398, %v426
        %v429 = vmul.f32 %v312, %v381
        %v430 = vmul.f32 %v313, %v383
        %v431 = vsel %vm318, %v429, 0.0
        %v432 = vrot.slane %v431, 4
        %v433 = vadd.f32 %v431, %v432
        %v434 = vrot.slane %v433, 2
        %v435 = vadd.f32 %v433, %v434
        %v436 = vrot.slane %v435, 1
        %v437 = vadd.f32 %v435, %v436
        %v438 = vsel %vm318, %v430, 0.0
        %v439 = vrot.slane %v438, 4
        %v440 = vadd.f32 %v438, %v439
        %v441 = vrot.slane %v440, 2
        %v442 = vadd.f32 %v440, %v441
        %v443 = vrot.slane %v442, 1
        %v444 = vadd.f32 %v442, %v443
        %v445 = vsub.f32 %v427, %v437
        %v446 = vsub.f32 %v428, %v444
        %v447 = vmul.f32 %v445, 0.4
        %v448 = vmul.f32 %v446, 0.4
        %v449 = vadd.f32 %v379, %v447
        %v450 = vadd.f32 %v380, %v448
        %v451 = vld [vmem:[#allocation2] sm:$0x3]
        %v454 = vcombine.low %v449, %v450
        %v456 = vunpack.c.l.s4 1966171168
        %v457 = vunpack.c.0.s8 %v456
        %v458 = vlaneseq
        %v459 = vshrl.u32 %v458, 7
        %v460 = vsub.s32 %v457, %v459
        %v461 = vrot.slane %v454, %v460
        %v463 = vunpack.c.l.s4 1966171168
        %v464 = vunpack.c.0.s8 %v463
        %v465 = vlaneseq
        %v466 = vshrl.u32 %v465, 7
        %v467 = vsub.s32 %v464, %v466
        %v468 = vrot.slane %v461, %v467
        %v470 = vsel %vm297, %v468, 0.0
        %v471 = vadd.f32 %v451, %v470
        %v472 = vlaneseq
        %vm473 = vcmp.ge.s32.totalorder %v472, 0
        %vm474 = vcmp.lt.s32.totalorder %v472, 256
        %vm475 = vmand %vm473, %vm474
        %476 = vst.msk [vmem:[#allocation2] sm:$0x3] %vm475, %v471
        // Predicated region
        $region49: #{tpu_custom_call.1} parent=31 // pred_check
          %p477 = pneg %p287
        $region50: #{tpu_custom_call.1} parent=31 // pred_check_branch
          %479 = sbr.rel (%p477) target = $region52
        $region51: #{tpu_custom_call.1} parent=31 // pred_region
          %v480 = vld [vmem:[#allocation2] sm:$0x3]
          %481 = vst.msk [vmem:[%s283] sm:$0x3] %vm475, %v480
        $region52: #{tpu_custom_call.1} parent=31 // pred_fallthru
          _
        %s482 = sand.u32 %s127, 1
        %s483 = scalar_lea.sflag [#allocation5], %s482
        %s484 = sand.u32 %s127, 1
        %s485 = smul.addr %s484, 2
        %s486 = scalar_lea.vmem [#allocation9], %s485
        // Predicated region
        $region53: #{tpu_custom_call.1} parent=31 // pred_check
          %p487 = pneg %p137
        $region54: #{tpu_custom_call.1} parent=31 // pred_check_branch
          %489 = sbr.rel (%p487) target = $region56
        $region55: #{tpu_custom_call.1} parent=31 // pred_region
          %s491 = ssub.s32 32, 32
          %492 = vsyncadd %s483, %s491
          %s493 = smul.addr %s27, 2
          %s494 = smul.addr %s493, 16
          %s495 = scalar_lea.hbm %s3, %s494
          %s497 = sshll.u32 %s486, 4
          %s498 = int_to_ptr.vmem [resolvable:$true] %s497
          %500 = dma.vmem_to_hbm [thread:$0]  %s498, 32, %s495, %s483
        $region56: #{tpu_custom_call.1} parent=31 // pred_fallthru
          _
      $region32: #{tpu_custom_call.1} parent=5 // pred_fallthru
        _
      %p501 = scmp.le.s32.totalorder 2, %s18
      // Predicated region
      $region57: #{tpu_custom_call.1} parent=5 // pred_check
        %p502 = pneg %p501
      $region58: #{tpu_custom_call.1} parent=5 // pred_check_branch
        %504 = sbr.rel (%p502) target = $region60
      $region59: #{tpu_custom_call.1} parent=5 // pred_region
        %s505 = ssub.s32 %s18, 2
        // Predicated region
        $region61: #{tpu_custom_call.1} parent=59 // pred_check
          %p506 = pneg %p143
        $region62: #{tpu_custom_call.1} parent=59 // pred_check_branch
          %508 = sbr.rel (%p506) target = $region64
        $region63: #{tpu_custom_call.1} parent=59 // pred_region
          %s509 = sand.u32 %s128, 1
          %s510 = scalar_lea.sflag [#allocation5], %s509
          %s511 = sand.u32 %s128, 1
          %s512 = smul.addr %s511, 2
          %s513 = scalar_lea.vmem [#allocation9], %s512
          %514 = dma.done %s510, 32
        $region64: #{tpu_custom_call.1} parent=59 // pred_fallthru
          _
      $region60: #{tpu_custom_call.1} parent=5 // pred_fallthru
        _
    $region6: #{tpu_custom_call.1} parent=1 // loop_footer
      %s22 = sadd.s32 1, %s18
    $region7: #{tpu_custom_call.1} parent=1 // loop_footer_branch
      %17 = sbr.rel target = $region3
    $region8: #{tpu_custom_call.1} parent=1 // loop_exit
      _
    %515 = vsyncpa [#allocation4], 1
    %s516 = scalar_lea.sflag [#allocation4], 1
    %517 = vsyncpa %s516, 1
    %518 = vsyncpa [#allocation7], 1
    %s519 = scalar_lea.sflag [#allocation7], 1
    %520 = vsyncpa %s519, 1
    %521 = vsyncpa [#allocation5], 1
    %s522 = scalar_lea.sflag [#allocation5], 1
    %523 = vsyncpa %s522, 1

</llo_original>
